<compile_context>
chip_gen: v6e
topology: v6e:2x2x1
jax: 0.10.0
libtpu: 0.0.40
codegen_flags: <defaults>
</compile_context>

<pallas_src>
import jax
import jax.numpy as jnp
from jax.experimental import pallas as pl
from jax.experimental.pallas import tpu as pltpu


# ----------------------------------------------------------------------------
# Fused kernel bodies.  Each grid point handles one (batch, lane-tile) block:
#   [ x | x_coord, y_coord (, r) | xx_boundary, yy_boundary ]
# ----------------------------------------------------------------------------
def _make_addcoords_kernel(C, n_coord, with_boundary):
    if with_boundary:
        def kernel(x_ref, coords_ref, hm_ref, o_ref):
            # x_ref:      (1, C, T)        input activations (x.dtype)
            # coords_ref: (n_coord, T)     constant coordinate maps (f32)
            # hm_ref:     (1, 1, T)        heatmap LAST channel only
            # o_ref:      (1, C+n_coord+2, T)  output (x.dtype)
            o_ref[:, :C, :] = x_ref[...]

            coords = coords_ref[...]                             # (n_coord, T) f32
            o_ref[:, C:C + n_coord, :] = coords[None].astype(o_ref.dtype)

            # where(clamp(hm,0,1) > 0.05, coord, 0)  ==  where(hm > 0.05, coord, 0)
            mask = hm_ref[...].astype(jnp.float32) > 0.05        # (1, 1, T)
            xy = coords[0:2, :][None]                            # (1, 2, T) f32
            o_ref[:, C + n_coord:C + n_coord + 2, :] = jnp.where(
                mask, xy, 0.0).astype(o_ref.dtype)
        return kernel
    else:
        def kernel(x_ref, coords_ref, o_ref):
            o_ref[:, :C, :] = x_ref[...]
            o_ref[:, C:C + n_coord, :] = coords_ref[...][None].astype(o_ref.dtype)
        return kernel


def _pick_lane_tile(HW, row_bytes_per_lane, max_lanes=2048, vmem_target=8 << 20):
    """Largest multiple of 128 that divides HW, <= max_lanes, fitting the VMEM target."""
    if HW % 128 != 0:
        # TODO(synk): non-128-multiple spatial sizes -> single (masked-store) block along HW
        return HW
    t = min(HW, max_lanes)
    t -= t % 128
    while t > 128 and (HW % t != 0 or t * row_bytes_per_lane > vmem_target):
        t -= 128
    return max(t, 128)


# ----------------------------------------------------------------------------
# Module wrapper (same semantics as the PyTorch AddCoordsTh)
# ----------------------------------------------------------------------------
class AddCoordsTh:
    def __init__(self, height=64, width=64, with_r=False, with_boundary=False):
        self.H, self.W = height, width
        self.with_r = with_r
        self.with_boundary = with_boundary

        # --- precomputed coordinate maps (same math as the PyTorch __init__) ---
        xs = jnp.arange(height, dtype=jnp.float32)[:, None] * jnp.ones((1, width), jnp.float32)
        ys = jnp.arange(width, dtype=jnp.float32)[None, :] * jnp.ones((height, 1), jnp.float32)
        x_coords = xs / (height - 1) * 2.0 - 1.0           # varies along H
        y_coords = ys / (width - 1) * 2.0 - 1.0            # varies along W
        coords = jnp.stack([x_coords, y_coords], axis=0)   # (2, H, W)
        if with_r:
            rr = jnp.sqrt(x_coords ** 2 + y_coords ** 2)
            rr = (rr / jnp.max(rr))[None, :, :]
            coords = jnp.concatenate([coords, rr], axis=0)
        self.n_coord = coords.shape[0]
        self.coords = coords[None]                         # (1, n_coord, H, W) - reference
        self.x_coords = x_coords
        self.y_coords = y_coords
        # lane-dense constant operand, computed once per module
        self.coords_flat = coords.reshape(self.n_coord, height * width)

    def __call__(self, x, heatmap=None):
        B, C, H, W = x.shape
        HW = H * W
        use_boundary = self.with_boundary and heatmap is not None
        n_extra = 2 if use_boundary else 0
        cout = C + self.n_coord + n_extra
        out_dtype = x.dtype

        # contiguous (free) reshape to the lane-dense (..., H*W) layout
        x_flat = x.reshape(B, C, HW)

        # per-lane resident bytes (double-buffered) -> lane-tile size
        isz_x = jnp.dtype(x.dtype).itemsize
        isz_o = jnp.dtype(out_dtype).itemsize
        row_bytes = 2 * (C * isz_x + self.n_coord * 4 + cout * isz_o)
        if use_boundary:
            row_bytes += 2 * jnp.dtype(heatmap.dtype).itemsize
        T = _pick_lane_tile(HW, row_bytes)
        grid = (B, HW // T)

        kernel = _make_addcoords_kernel(C, self.n_coord, use_boundary)

        in_specs = [
            pl.BlockSpec((1, C, T), lambda b, j: (b, 0, j)),
            pl.BlockSpec((self.n_coord, T), lambda b, j: (0, j)),
        ]
        args = [x_flat, self.coords_flat]
        if use_boundary:
            # hand the kernel ONLY the last heatmap channel (heat_ch x less DMA)
            hm_last = heatmap[:, -1:, :, :].reshape(B, 1, HW)
            in_specs.append(pl.BlockSpec((1, 1, T), lambda b, j: (b, 0, j)))
            args.append(hm_last)

        out_flat = pl.pallas_call(
            kernel,
            out_shape=jax.ShapeDtypeStruct((B, cout, HW), out_dtype),
            grid=grid,
            in_specs=in_specs,
            out_specs=pl.BlockSpec((1, cout, T), lambda b, j: (b, 0, j)),
            compiler_params=pltpu.CompilerParams(
                dimension_semantics=("parallel", "parallel")),
        )(*args)

        return out_flat.reshape(B, cout, H, W)


if __name__ == "__main__":
    key = jax.random.PRNGKey(0)
    kx, kh = jax.random.split(key)

    B, C, H, W = 2, 4, 16, 16
    x = jax.random.normal(kx, (B, C, H, W), jnp.float32)
    heatmap = jax.random.uniform(kh, (B, 5, H, W), jnp.float32, -0.5, 1.5)

    mod = AddCoordsTh(height=H, width=W, with_r=True, with_boundary=True)
    out = jax.block_until_ready(mod(x, heatmap))

    # --- self-check against a pure-JAX reference of the same forward ---
    coords_b = jnp.broadcast_to(mod.coords, (B,) + mod.coords.shape[1:])
    bc = jnp.clip(heatmap[:, -1:, :, :], 0.0, 1.0)
    xx = jnp.where(bc > 0.05, mod.x_coords, 0.0)
    yy = jnp.where(bc > 0.05, mod.y_coords, 0.0)
    ref = jnp.concatenate([x, coords_b, xx, yy], axis=1)

    assert out.shape == (B, C + 3 + 2, H, W), out.shape
    assert out.dtype == x.dtype, out.dtype
    assert jnp.allclose(out, ref, atol=1e-6, rtol=1e-6)

    # --- also exercise the no-boundary / no-r path ---
    mod2 = AddCoordsTh(height=H, width=W, with_r=False, with_boundary=False)
    out2 = jax.block_until_ready(mod2(x))
    ref2 = jnp.concatenate(
        [x, jnp.broadcast_to(mod2.coords, (B, 2, H, W))], axis=1)
    assert out2.shape == (B, C + 2, H, W), out2.shape
    assert jnp.allclose(out2, ref2, atol=1e-6, rtol=1e-6)

    print("KERNEL_OK")
</pallas_src>

<mosaic_0001>
module attributes {stable_mosaic.version = 11 : i64} {
  func.func @kernel(%arg0: i32, %arg1: i32, %arg2: memref<1x4x256xf32, #tpu.memory_space<vmem>>, %arg3: memref<3x256xf32, #tpu.memory_space<vmem>>, %arg4: memref<1x1x256xf32, #tpu.memory_space<vmem>>, %arg5: memref<1x9x256xf32, #tpu.memory_space<vmem>>) attributes {dimension_semantics = [#tpu.dimension_semantics<parallel>, #tpu.dimension_semantics<parallel>], iteration_bounds = array<i64: 2, 1>, scalar_prefetch = 0 : i64, scratch_operands = 0 : i64, tpu.core_type = #tpu.core_type<tc>, window_params = [{transform_indices = @transform_0, window_bounds = array<i64: 1, 4, 256>}, {transform_indices = @transform_1, window_bounds = array<i64: 3, 256>}, {transform_indices = @transform_2, window_bounds = array<i64: 1, 1, 256>}, {transform_indices = @transform_3, window_bounds = array<i64: 1, 9, 256>}]} {
    %c0 = arith.constant 0 : index
    %c0_0 = arith.constant 0 : index
    %c0_1 = arith.constant 0 : index
    %0 = vector.load %arg2[%c0, %c0_0, %c0_1] : memref<1x4x256xf32, #tpu.memory_space<vmem>>, vector<1x4x256xf32>
    %c0_2 = arith.constant 0 : index
    %c0_3 = arith.constant 0 : index
    %c0_4 = arith.constant 0 : index
    %1 = vector.load %arg5[%c0_2, %c0_3, %c0_4] : memref<1x9x256xf32, #tpu.memory_space<vmem>>, vector<1x4x256xf32>
    tpu.vector_store %arg5[%c0_2, %c0_3, %c0_4], %0 {strides = array<i32>} : memref<1x9x256xf32, #tpu.memory_space<vmem>>, vector<1x4x256xf32>,
    %c0_5 = arith.constant 0 : index
    %c0_6 = arith.constant 0 : index
    %2 = vector.load %arg3[%c0_5, %c0_6] : memref<3x256xf32, #tpu.memory_space<vmem>>, vector<3x256xf32>
    %3 = vector.shape_cast %2 : vector<3x256xf32> to vector<1x3x256xf32>
    %c0_7 = arith.constant 0 : index
    %c4 = arith.constant 4 : index
    %c0_8 = arith.constant 0 : index
    %4 = vector.load %arg5[%c0_7, %c4, %c0_8] : memref<1x9x256xf32, #tpu.memory_space<vmem>>, vector<1x3x256xf32>
    tpu.vector_store %arg5[%c0_7, %c4, %c0_8], %3 {strides = array<i32>} : memref<1x9x256xf32, #tpu.memory_space<vmem>>, vector<1x3x256xf32>,
    %c0_9 = arith.constant 0 : index
    %c0_10 = arith.constant 0 : index
    %c0_11 = arith.constant 0 : index
    %5 = vector.load %arg4[%c0_9, %c0_10, %c0_11] : memref<1x1x256xf32, #tpu.memory_space<vmem>>, vector<1x1x256xf32>
    %cst = arith.constant 5.000000e-02 : f32
    %6 = vector.broadcast %cst : f32 to vector<1x1x256xf32>
    %7 = arith.cmpf ogt, %5, %6 : vector<1x1x256xf32>
    %8 = vector.extract_strided_slice %2 {offsets = [0, 0], sizes = [2, 256], strides = [1, 1]} : vector<3x256xf32> to vector<2x256xf32>
    %9 = vector.shape_cast %8 : vector<2x256xf32> to vector<1x2x256xf32>
    %cst_12 = arith.constant 0.000000e+00 : f32
    %10 = vector.shape_cast %7 : vector<1x1x256xi1> to vector<1x1x256xi1>
    %11 = vector.broadcast %10 : vector<1x1x256xi1> to vector<1x2x256xi1>
    %12 = vector.broadcast %cst_12 : f32 to vector<1x2x256xf32>
    %13 = arith.select %11, %9, %12 : vector<1x2x256xi1>, vector<1x2x256xf32>
    %c0_13 = arith.constant 0 : index
    %c7 = arith.constant 7 : index
    %c0_14 = arith.constant 0 : index
    %14 = vector.load %arg5[%c0_13, %c7, %c0_14] : memref<1x9x256xf32, #tpu.memory_space<vmem>>, vector<1x2x256xf32>
    tpu.vector_store %arg5[%c0_13, %c7, %c0_14], %13 {strides = array<i32>} : memref<1x9x256xf32, #tpu.memory_space<vmem>>, vector<1x2x256xf32>,
    return
  }
  func.func @transform_0(%arg0: i32, %arg1: i32) -> (i32, i32, i32) {
    %c0_i32 = arith.constant 0 : i32
    %c0_i32_0 = arith.constant 0 : i32
    return %arg0, %c0_i32, %arg1 : i32, i32, i32
  }
  func.func @transform_1(%arg0: i32, %arg1: i32) -> (i32, i32) {
    %c0_i32 = arith.constant 0 : i32
    %c0_i32_0 = arith.constant 0 : i32
    return %c0_i32, %arg1 : i32, i32
  }
  func.func @transform_2(%arg0: i32, %arg1: i32) -> (i32, i32, i32) {
    %c0_i32 = arith.constant 0 : i32
    %c0_i32_0 = arith.constant 0 : i32
    return %arg0, %c0_i32, %arg1 : i32, i32, i32
  }
  func.func @transform_3(%arg0: i32, %arg1: i32) -> (i32, i32, i32) {
    %c0_i32 = arith.constant 0 : i32
    %c0_i32_0 = arith.constant 0 : i32
    return %arg0, %c0_i32, %arg1 : i32, i32, i32
  }
}

</mosaic_0001>

<llo_original>
// kernel: tpu_custom_call.1
$region0: #{tpu_custom_call.1}
  #allocation0 [shape = 'u32[]', space=smem, size = 0x4, offset = 0x4, fixed_abs, tag = 'smem constant byte address 0x4 - core index']
  #allocation1 [shape = 'u32[144,128]{1,0:T(1,128)}', space=vmem, size = 0x12000, scoped, tag = 'internal scratch']
  %s0 = inlined_call_operand.hbm [shape: f32[2,4,256], index: 0, kind: input, shape index: {}]
  %s1 = inlined_call_operand.hbm [shape: f32[3,256], index: 1, kind: input, shape index: {}]
  %s2 = inlined_call_operand.hbm [shape: f32[2,1,256], index: 2, kind: input, shape index: {}]
  %s3 = inlined_call_operand.vmem [shape: f32[2,9,256], index: 3, kind: output, shape index: {}]
  %s4 = sld [smem:[#allocation0]]
  $region57: #{tpu_custom_call.1} parent=0
    _
  %s6 = ssub.s32 1, %s4
  %s7 = scalar_select 0, %s6, %s4
  $region1: #{tpu_custom_call.1} parent=0
    #allocation2 [shape = 'u8[8192]{0}', space=vmem, size = 0x2000, scoped, tag = 'input window, operand 0']
    #allocation3 [shape = 's32[2]{0}', space=sflag, size = 0x8, scoped, tag = 'scoped memory for tpu_custom_call.1']
    #allocation4 [shape = 'u8[4096]{0}', space=vmem, size = 0x1000, scoped, tag = 'input window, operand 1, single buffered']
    #allocation5 [shape = 's32[1]{0}', space=sflag, size = 0x4, scoped, tag = 'scoped memory for tpu_custom_call.1']
    #allocation6 [shape = 'u8[2048]{0}', space=vmem, size = 0x800, scoped, tag = 'input window, operand 2']
    %8 = vsyncpa [#allocation3], 0
    %s9 = scalar_lea.sflag [#allocation3], 1
    %10 = vsyncpa %s9, 0
    %11 = vsyncpa [#allocation5], 0
    loop: start=0, step=1, limit=4
    $region2: #{tpu_custom_call.1} parent=1 // loop_pre_header
      _
    $region3: #{tpu_custom_call.1} parent=1 // loop_header
      %s13 = sphi 0, %s17
      %p14 = scmp.ge.s32.totalorder %s13, 4
      %s20 = sphi 0, %s32
      %s21 = sphi 0, %s28
      %s22 = sphi 0, %s20
      %s23 = sphi 0, %s21
      %s24 = sphi 0, %s22
      %s25 = sphi 0, %s23
      %s37 = sphi 0, %s39
      %s40 = sphi 0, %s37
      %s41 = sphi 0, %s40
      %s57 = sphi 0, %s41
      %s63 = sphi 0, %s65
      %s66 = sphi 0, %s63
      %s67 = sphi 0, %s66
      %s83 = sphi 0, %s67
      %s91 = sphi 0, %s93
      %s94 = sphi 0, %s91
      %s95 = sphi 0, %s94
      %s111 = sphi 0, %s95
      %s119 = sphi 0, %s121
      %s122 = sphi 0, %s119
      %s123 = sphi 0, %s122
      %s139 = sphi 0, %s123
    $region4: #{tpu_custom_call.1} parent=1 // loop_header_branch
      %16 = sbr.rel (%p14) target = $region8
    $region5: #{tpu_custom_call.1} parent=1 // loop_body
      %s18 = ssub.s32 %s13, 1
      %s19 = ssub.s32 %s13, 2
      %s26 = sadd.s32 1, %s21
      %p27 = scmp.ge.s32.totalorder %s26, 1
      %s28 = scalar_select %p27, 0, %s26
      %s29 = sadd.s32 1, %s20
      %s30 = scalar_select %p27, %s29, %s20
      %p31 = scmp.ge.s32.totalorder %s30, 2
      %s32 = scalar_select %p31, 0, %s30
      %s33 = ssub.s32 %s20, %s32
      %s34 = ssub.s32 %s21, %s28
      %s35 = sor.u32 %s33, %s34
      %p36 = scmp.eq.s32.totalorder %s35, 0
      %s38 = sadd.s32 %s37, 1
      %s39 = scalar_select %p36, %s37, %s38
      %p42 = pneg %p36
      %p43 = scmp.eq.s32.totalorder %s13, 1
      %p44 = por %p42, %p43
      %p45 = scmp.ne.s32.totalorder %s37, %s40
      %p46 = scmp.eq.s32.totalorder %s13, 0
      %p47 = por %p45, %p46
      %p48 = scmp.ne.s32.totalorder %s37, %s40
      %p49 = scmp.eq.s32.totalorder %s18, 1
      %p50 = por %p48, %p49
      %p51 = scmp.ne.s32.totalorder %s40, %s41
      %p52 = scmp.eq.s32.totalorder %s18, 0
      %p53 = por %p51, %p52
      %p54 = scmp.ne.s32.totalorder %s40, %s41
      %p55 = scmp.eq.s32.totalorder %s19, 1
      %p56 = por %p54, %p55
      %p58 = scmp.ne.s32.totalorder %s41, %s57
      %p59 = scmp.eq.s32.totalorder %s19, 0
      %p60 = por %p58, %p59
      %s61 = ssub.s32 %s21, %s28
      %p62 = scmp.eq.s32.totalorder %s61, 0
      %s64 = sadd.s32 %s63, 1
      %s65 = scalar_select %p62, %s63, %s64
      %p68 = pneg %p62
      %p69 = scmp.eq.s32.totalorder %s13, 1
      %p70 = por %p68, %p69
      %p71 = scmp.ne.s32.totalorder %s63, %s66
      %p72 = scmp.eq.s32.totalorder %s13, 0
      %p73 = por %p71, %p72
      %p74 = scmp.ne.s32.totalorder %s63, %s66
      %p75 = scmp.eq.s32.totalorder %s18, 1
      %p76 = por %p74, %p75
      %p77 = scmp.ne.s32.totalorder %s66, %s67
      %p78 = scmp.eq.s32.totalorder %s18, 0
      %p79 = por %p77, %p78
      %p80 = scmp.ne.s32.totalorder %s66, %s67
      %p81 = scmp.eq.s32.totalorder %s19, 1
      %p82 = por %p80, %p81
      %p84 = scmp.ne.s32.totalorder %s67, %s83
      %p85 = scmp.eq.s32.totalorder %s19, 0
      %p86 = por %p84, %p85
      %s87 = ssub.s32 %s20, %s32
      %s88 = ssub.s32 %s21, %s28
      %s89 = sor.u32 %s87, %s88
      %p90 = scmp.eq.s32.totalorder %s89, 0
      %s92 = sadd.s32 %s91, 1
      %s93 = scalar_select %p90, %s91, %s92
      %p96 = pneg %p90
      %p97 = scmp.eq.s32.totalorder %s13, 1
      %p98 = por %p96, %p97
      %p99 = scmp.ne.s32.totalorder %s91, %s94
      %p100 = scmp.eq.s32.totalorder %s13, 0
      %p101 = por %p99, %p100
      %p102 = scmp.ne.s32.totalorder %s91, %s94
      %p103 = scmp.eq.s32.totalorder %s18, 1
      %p104 = por %p102, %p103
      %p105 = scmp.ne.s32.totalorder %s94, %s95
      %p106 = scmp.eq.s32.totalorder %s18, 0
      %p107 = por %p105, %p106
      %p108 = scmp.ne.s32.totalorder %s94, %s95
      %p109 = scmp.eq.s32.totalorder %s19, 1
      %p110 = por %p108, %p109
      %p112 = scmp.ne.s32.totalorder %s95, %s111
      %p113 = scmp.eq.s32.totalorder %s19, 0
      %p114 = por %p112, %p113
      %s115 = ssub.s32 %s20, %s32
      %s116 = ssub.s32 %s21, %s28
      %s117 = sor.u32 %s115, %s116
      %p118 = scmp.eq.s32.totalorder %s117, 0
      %s120 = sadd.s32 %s119, 1
      %s121 = scalar_select %p118, %s119, %s120
      %p124 = pneg %p118
      %p125 = scmp.eq.s32.totalorder %s13, 1
      %p126 = por %p124, %p125
      %p127 = scmp.ne.s32.totalorder %s119, %s122
      %p128 = scmp.eq.s32.totalorder %s13, 0
      %p129 = por %p127, %p128
      %p130 = scmp.ne.s32.totalorder %s119, %s122
      %p131 = scmp.eq.s32.totalorder %s18, 1
      %p132 = por %p130, %p131
      %p133 = scmp.ne.s32.totalorder %s122, %s123
      %p134 = scmp.eq.s32.totalorder %s18, 0
      %p135 = por %p133, %p134
      %p136 = scmp.ne.s32.totalorder %s122, %s123
      %p137 = scmp.eq.s32.totalorder %s19, 1
      %p138 = por %p136, %p137
      %p140 = scmp.ne.s32.totalorder %s123, %s139
      %p141 = scmp.eq.s32.totalorder %s19, 0
      %p142 = por %p140, %p141
      %p143 = scmp.le.s32.totalorder 1, %s13
      %p144 = scmp.lt.s32.totalorder %s13, 3
      %p145 = pnand %p143, %p144
      %p146 = pneg %p145
      // Predicated region
      $region9: #{tpu_custom_call.1} parent=5 // pred_check
        _
      $region10: #{tpu_custom_call.1} parent=5 // pred_check_branch
        %148 = sbr.rel (%p145) target = $region12
      $region11: #{tpu_custom_call.1} parent=5 // pred_region
        %s149 = ssub.s32 %s13, 1
        // Predicated region
        $region13: #{tpu_custom_call.1} parent=11 // pred_check
          %p150 = pneg %p79
        $region14: #{tpu_custom_call.1} parent=11 // pred_check_branch
          %152 = sbr.rel (%p150) target = $region16
        $region15: #{tpu_custom_call.1} parent=11 // pred_region
          %s153 = smul.u32 2, %s23
          %s155 = ssub.s32 128, 128
          %156 = vsyncadd [#allocation5], %s155
          %s157 = smul.addr %s153, 64
          %s158 = scalar_lea.hbm %s1, %s157
          %s160 = sshll.u32 [#allocation4], 4
          %s161 = int_to_ptr.vmem [resolvable:$true] %s160
          %163 = dma.hbm_to_vmem [thread:$0]  %s158, 128, %s161, [#allocation5]
        $region16: #{tpu_custom_call.1} parent=11 // pred_fallthru
          _
      $region12: #{tpu_custom_call.1} parent=5 // pred_fallthru
        _
      %p164 = scmp.lt.s32.totalorder %s13, 2
      // Predicated region
      $region17: #{tpu_custom_call.1} parent=5 // pred_check
        %p165 = pneg %p164
      $region18: #{tpu_custom_call.1} parent=5 // pred_check_branch
        %167 = sbr.rel (%p165) target = $region20
      $region19: #{tpu_custom_call.1} parent=5 // pred_region
        // Predicated region
        $region21: #{tpu_custom_call.1} parent=19 // pred_check
          %p168 = pneg %p47
        $region22: #{tpu_custom_call.1} parent=19 // pred_check_branch
          %170 = sbr.rel (%p168) target = $region24
        $region23: #{tpu_custom_call.1} parent=19 // pred_region
          %s171 = sand.u32 %s13, 1
          %s172 = scalar_lea.sflag [#allocation3], %s171
          %s173 = sand.u32 %s37, 1
          %s174 = smul.addr %s173, 8
          %s175 = scalar_lea.vmem [#allocation2], %s174
          %s176 = smul.u32 2, %s21
          %s178 = ssub.s32 128, 128
          %179 = vsyncadd %s172, %s178
          %s180 = smul.addr %s20, 2
          %s181 = sadd.s32 %s176, %s180
          %s182 = smul.addr %s181, 64
          %s183 = scalar_lea.hbm %s0, %s182
          %s185 = sshll.u32 %s175, 4
          %s186 = int_to_ptr.vmem [resolvable:$true] %s185
          %188 = dma.hbm_to_vmem [thread:$0]  %s183, 128, %s186, %s172
        $region24: #{tpu_custom_call.1} parent=19 // pred_fallthru
          _
        // Predicated region
        $region25: #{tpu_custom_call.1} parent=19 // pred_check
          %p189 = pneg %p101
        $region26: #{tpu_custom_call.1} parent=19 // pred_check_branch
          %191 = sbr.rel (%p189) target = $region28
        $region27: #{tpu_custom_call.1} parent=19 // pred_region
          %s192 = sand.u32 %s13, 1
          %s193 = scalar_lea.sflag [#allocation3], %s192
          %s194 = sand.u32 %s91, 1
          %s195 = smul.addr %s194, 2
          %s196 = scalar_lea.vmem [#allocation6], %s195
          %s197 = smul.u32 2, %s21
          %s199 = ssub.s32 32, 32
          %200 = vsyncadd %s193, %s199
          %s201 = smul.addr %s20, 2
          %s202 = sadd.s32 %s197, %s201
          %s203 = smul.addr %s202, 16
          %s204 = scalar_lea.hbm %s2, %s203
          %s206 = sshll.u32 %s196, 4
          %s207 = int_to_ptr.vmem [resolvable:$true] %s206
          %209 = dma.hbm_to_vmem [thread:$0]  %s204, 32, %s207, %s193
        $region28: #{tpu_custom_call.1} parent=19 // pred_fallthru
          _
      $region20: #{tpu_custom_call.1} parent=5 // pred_fallthru
        _
      %p210 = scmp.le.s32.totalorder 1, %s13
      %p211 = scmp.lt.s32.totalorder %s13, 3
      %p212 = pnand %p210, %p211
      %p213 = pneg %p212
      // Predicated region
      $region29: #{tpu_custom_call.1} parent=5 // pred_check
        _
      $region30: #{tpu_custom_call.1} parent=5 // pred_check_branch
        %215 = sbr.rel (%p212) target = $region32
      $region31: #{tpu_custom_call.1} parent=5 // pred_region
        %s216 = ssub.s32 %s13, 1
        %s217 = sand.u32 %s18, 1
        %s218 = scalar_lea.sflag [#allocation3], %s217
        %s219 = sand.u32 %s40, 1
        %s220 = smul.addr %s219, 8
        %s221 = scalar_lea.vmem [#allocation2], %s220
        // Predicated region
        $region33: #{tpu_custom_call.1} parent=31 // pred_check
          %p222 = pneg %p53
        $region34: #{tpu_custom_call.1} parent=31 // pred_check_branch
          %224 = sbr.rel (%p222) target = $region36
        $region35: #{tpu_custom_call.1} parent=31 // pred_region
          %225 = dma.done %s218, 128
        $region36: #{tpu_custom_call.1} parent=31 // pred_fallthru
          _
        // Predicated region
        $region37: #{tpu_custom_call.1} parent=31 // pred_check
          %p226 = pneg %p79
        $region38: #{tpu_custom_call.1} parent=31 // pred_check_branch
          %228 = sbr.rel (%p226) target = $region40
        $region39: #{tpu_custom_call.1} parent=31 // pred_region
          %229 = dma.done [#allocation5], 128
        $region40: #{tpu_custom_call.1} parent=31 // pred_fallthru
          _
        %s230 = sand.u32 %s18, 1
        %s231 = scalar_lea.sflag [#allocation3], %s230
        %s232 = sand.u32 %s94, 1
        %s233 = smul.addr %s232, 2
        %s234 = scalar_lea.vmem [#allocation6], %s233
        // Predicated region
        $region41: #{tpu_custom_call.1} parent=31 // pred_check
          %p235 = pneg %p107
        $region42: #{tpu_custom_call.1} parent=31 // pred_check_branch
          %237 = sbr.rel (%p235) target = $region44
        $region43: #{tpu_custom_call.1} parent=31 // pred_region
          %238 = dma.done %s231, 32
        $region44: #{tpu_custom_call.1} parent=31 // pred_fallthru
          _
        %s239 = sand.u32 %s18, 1
        %s240 = scalar_lea.sflag [#allocation3], %s239
        %s241 = sand.u32 %s40, 1
        %s242 = smul.addr %s241, 8
        %s243 = scalar_lea.vmem [#allocation2], %s242
        %p244 = pneg %p53
        %p245 = pneg %p50
        %p246 = pneg %p79
        %p247 = pneg %p76
        %s248 = sand.u32 %s18, 1
        %s249 = scalar_lea.sflag [#allocation3], %s248
        %s250 = sand.u32 %s94, 1
        %s251 = smul.addr %s250, 2
        %s252 = scalar_lea.vmem [#allocation6], %s251
        %p253 = pneg %p107
        %p254 = pneg %p104
        %p255 = pneg %p135
        %p256 = pneg %p132
        %s257 = smul.u32 2, %s23
        %p258 = scmp.lt.s32.totalorder %s22, 1
        %s259 = scalar_select %p258, %s22, 1
        %p260 = scmp.lt.s32.totalorder %s257, 1
        %s261 = scalar_select %p260, %s257, 1
        %s262 = smul.addr %s259, 4
        %s263 = sadd.s32 %s261, %s262
        %s264 = smul.addr %s263, 8
        %s265 = scalar_lea.vmem %s3, %s264
        %s266 = smul.u32 2, %s23
        %s267 = smul.u32 2, %s23
        %s268 = smul.u32 2, %s23
        %s269 = smul.u32 2, %s23
        %p270 = scmp.lt.s32.totalorder %s22, 1
        %s271 = scalar_select %p270, %s22, 1
        %p272 = scmp.lt.s32.totalorder %s269, 1
        %s273 = scalar_select %p272, %s269, 1
        %s274 = smul.addr %s271, 4
        %s275 = sadd.s32 %s273, %s274
        %s276 = smul.addr %s275, 8
        %s277 = scalar_lea.vmem %s3, %s276
        %s278 = smul.u32 2, %s23
        %v279 = vld [vmem:[%s221] sm:$0xff]
        %v281 = vcombine.high %v279, %v279
        %283 = vst [vmem:[%s277] sm:$0xf] %v279
        %284 = vst [vmem:[%s277 + $0x8] sm:$0xf] %v281
        %v285 = vld [vmem:[#allocation4] sm:$0x77]
        %v287 = vcombine.low %v285, %v285
        %289 = vst [vmem:[%s277] sm:$0x70] %v287
        %290 = vst [vmem:[%s277 + $0x8] sm:$0x70] %v285
        %v291 = vld [vmem:[%s234] sm:$0x3]
        %vm292 = vcmp.gt.f32.partialorder %v291, 0.05
        %v293 = vsel %vm292, 1, 0
        %v294 = vlaneseq
        %v295 = vshrl.u32 %v294, 7
        %v296 = vsub.s32 0, %v295
        %v297 = vrot.slane %v293, %v296
        %v298 = vlaneseq
        %v299 = vshrl.u32 %v298, 7
        %v300 = vsub.s32 1, %v299
        %v301 = vrot.slane %v293, %v300
        %vm302 = vcmp.eq.s32.totalorder %v297, 1
        %vm303 = vcmp.eq.s32.totalorder %v301, 1
        %v304 = vcombine.high %v285, %v285
        %v306 = vsel %vm302, %v285, 0.0
        %v307 = vsel %vm303, %v304, 0.0
        %v310 = vrot.slane %v306, 1
        %v311 = vrot.slane %v307, 1
        %314 = vst [vmem:[%s277] sm:$0x80] %v310
        %315 = vst [vmem:[%s277 + $0x8] sm:$0x80] %v311
        %316 = vst [vmem:[%s277 + $0x10] sm:$0x1] %v310
        %317 = vst [vmem:[%s277 + $0x18] sm:$0x1] %v311
        %s318 = smul.u32 2, %s23
        %p319 = scmp.lt.s32.totalorder %s22, 1
        %s320 = scalar_select %p319, %s22, 1
        %p321 = scmp.lt.s32.totalorder %s318, 1
        %s322 = scalar_select %p321, %s318, 1
        %s323 = smul.addr %s320, 4
        %s324 = sadd.s32 %s322, %s323
        %s325 = smul.addr %s324, 8
        %s326 = scalar_lea.vmem %s3, %s325
        // Predicated region
        $region45: #{tpu_custom_call.1} parent=31 // pred_check
          %p327 = pneg %p132
        $region46: #{tpu_custom_call.1} parent=31 // pred_check_branch
          %329 = sbr.rel (%p327) target = $region48
        $region47: #{tpu_custom_call.1} parent=31 // pred_region
          %s330 = smul.u32 2, %s23
        $region48: #{tpu_custom_call.1} parent=31 // pred_fallthru
          _
      $region32: #{tpu_custom_call.1} parent=5 // pred_fallthru
        _
      %p331 = scmp.le.s32.totalorder 2, %s13
      // Predicated region
      $region49: #{tpu_custom_call.1} parent=5 // pred_check
        %p332 = pneg %p331
      $region50: #{tpu_custom_call.1} parent=5 // pred_check_branch
        %334 = sbr.rel (%p332) target = $region52
      $region51: #{tpu_custom_call.1} parent=5 // pred_region
        %s335 = ssub.s32 %s13, 2
        // Predicated region
        $region53: #{tpu_custom_call.1} parent=51 // pred_check
          %p336 = pneg %p138
        $region54: #{tpu_custom_call.1} parent=51 // pred_check_branch
          %338 = sbr.rel (%p336) target = $region56
        $region55: #{tpu_custom_call.1} parent=51 // pred_region
          %s339 = smul.u32 2, %s25
          %p340 = scmp.lt.s32.totalorder %s24, 1
          %s341 = scalar_select %p340, %s24, 1
          %p342 = scmp.lt.s32.totalorder %s339, 1
          %s343 = scalar_select %p342, %s339, 1
          %s344 = smul.addr %s341, 4
          %s345 = sadd.s32 %s343, %s344
          %s346 = smul.addr %s345, 8
          %s347 = scalar_lea.vmem %s3, %s346
        $region56: #{tpu_custom_call.1} parent=51 // pred_fallthru
          _
      $region52: #{tpu_custom_call.1} parent=5 // pred_fallthru
        _
    $region6: #{tpu_custom_call.1} parent=1 // loop_footer
      %s17 = sadd.s32 1, %s13
    $region7: #{tpu_custom_call.1} parent=1 // loop_footer_branch
      %12 = sbr.rel target = $region3
    $region8: #{tpu_custom_call.1} parent=1 // loop_exit
      _
    %348 = vsyncpa [#allocation3], 1
    %s349 = scalar_lea.sflag [#allocation3], 1
    %350 = vsyncpa %s349, 1
    %351 = vsyncpa [#allocation5], 1

</llo_original>
